<compile_context>
chip_gen: v5e
topology: v5e:2x2
jax: 0.10.0
libtpu: 0.0.40
codegen_flags: <defaults>
</compile_context>

<pallas_src>
import math
import functools

import jax
import jax.numpy as jnp
from jax.experimental import pallas as pl
from jax.experimental.pallas import tpu as pltpu


_LANE = 128
_VMEM_LIMIT_BYTES = 32 * 1024 * 1024  # explicit scoped-VMEM limit (safe on v5e/v6e/v7x)


def _round_up(v, m):
    return ((v + m - 1) // m) * m


def _pick_tile(dim, candidates=(512, 256, 128)):
    # dims are padded to multiples of 128, so 128 always divides.
    for c in candidates:
        if dim % c == 0:
            return c
    return dim


def _pad_last2(a, d0, d1):
    p0 = d0 - a.shape[-2]
    p1 = d1 - a.shape[-1]
    if p0 == 0 and p1 == 0:
        return a
    pad = [(0, 0)] * (a.ndim - 2) + [(0, p0), (0, p1)]
    return jnp.pad(a, pad)


# ---------------------------------------------------------------------------
# Stage 1: batch-fused weight matmul  support = X @ W
# ---------------------------------------------------------------------------
def _matmul_kernel(x_ref, w_ref, o_ref, acc_ref):
    @pl.when(pl.program_id(2) == 0)
    def _init():
        acc_ref[...] = jnp.zeros_like(acc_ref)

    acc_ref[...] += jnp.dot(x_ref[...], w_ref[...],
                            preferred_element_type=jnp.float32)

    @pl.when(pl.program_id(2) == pl.num_programs(2) - 1)
    def _done():
        o_ref[...] = acc_ref[...].astype(o_ref.dtype)


def _matmul(x, w, out_dtype):
    M, K = x.shape
    _, N = w.shape
    tm, tn, tk = _pick_tile(M), _pick_tile(N), _pick_tile(K)
    return pl.pallas_call(
        _matmul_kernel,
        out_shape=jax.ShapeDtypeStruct((M, N), out_dtype),
        grid_spec=pltpu.PrefetchScalarGridSpec(
            num_scalar_prefetch=0,
            grid=(M // tm, N // tn, K // tk),
            in_specs=[pl.BlockSpec((tm, tk), lambda i, j, k: (i, k)),
                      pl.BlockSpec((tk, tn), lambda i, j, k: (k, j))],
            out_specs=pl.BlockSpec((tm, tn), lambda i, j, k: (i, j)),
            scratch_shapes=[pltpu.VMEM((tm, tn), jnp.float32)]),
        compiler_params=pltpu.CompilerParams(
            dimension_semantics=("parallel", "parallel", "arbitrary"),
            vmem_limit_bytes=_VMEM_LIMIT_BYTES),
    )(x, w)


# ---------------------------------------------------------------------------
# Stage 2: batched adjacency matmul  out[b] = adj[b] @ support[b] + bias
# (bias add + optional LeakyReLU fused into the writeback epilogue)
# ---------------------------------------------------------------------------
def _bmm_bias_kernel(adj_ref, s_ref, b_ref, o_ref, acc_ref, *, slope):
    @pl.when(pl.program_id(3) == 0)
    def _init():
        acc_ref[...] = jnp.zeros_like(acc_ref)

    acc_ref[...] += jnp.dot(adj_ref[0], s_ref[0],
                            preferred_element_type=jnp.float32)

    @pl.when(pl.program_id(3) == pl.num_programs(3) - 1)
    def _done():
        v = acc_ref[...] + b_ref[...]          # bias add in f32 (VPU, free under MXU slack)
        if slope is not None:                   # fused LeakyReLU epilogue
            v = jnp.where(v >= 0, v, slope * v)
        o_ref[0] = v.astype(o_ref.dtype)


def _bmm_bias(adj, support, bias2d, out_dtype, slope):
    B, Np, _ = adj.shape
    _, _, Fp = support.shape
    tm, tn, tk = _pick_tile(Np), _pick_tile(Fp), _pick_tile(Np)
    kernel = functools.partial(_bmm_bias_kernel, slope=slope)
    return pl.pallas_call(
        kernel,
        out_shape=jax.ShapeDtypeStruct((B, Np, Fp), out_dtype),
        grid_spec=pltpu.PrefetchScalarGridSpec(
            num_scalar_prefetch=0,
            grid=(B, Np // tm, Fp // tn, Np // tk),
            in_specs=[pl.BlockSpec((1, tm, tk), lambda b, i, j, k: (b, i, k)),
                      pl.BlockSpec((1, tk, tn), lambda b, i, j, k: (b, k, j)),
                      pl.BlockSpec((1, tn), lambda b, i, j, k: (0, j))],
            out_specs=pl.BlockSpec((1, tm, tn), lambda b, i, j, k: (b, i, j)),
            scratch_shapes=[pltpu.VMEM((tm, tn), jnp.float32)]),
        compiler_params=pltpu.CompilerParams(
            dimension_semantics=("parallel", "parallel", "parallel", "arbitrary"),
            vmem_limit_bytes=_VMEM_LIMIT_BYTES),
    )(adj, support, bias2d)


# ---------------------------------------------------------------------------
# Public wrapper: GraphConvolution forward
# ---------------------------------------------------------------------------
def graph_convolution(x, adj, weight, bias=None, *, compute_dtype=None,
                      leaky_relu_slope=None):
    """GCN layer: adj @ (x @ weight) [+ bias] [with fused LeakyReLU epilogue].

    x: [B, N, Fin], adj: [B, N, N], weight: [Fin, Fout], bias: [1, 1, Fout] or None.
    compute_dtype: e.g. jnp.bfloat16 to halve VMEM/HBM traffic on v6e/v7x
                   (f32 accumulation kept; slight mantissa loss on `support`).
    """
    B, N, Fin = x.shape
    Fout = weight.shape[1]
    out_dtype = x.dtype
    cdt = x.dtype if compute_dtype is None else compute_dtype

    # Pad everything to lane-dense multiples of 128 (zero padding is exact).
    Np = _round_up(N, _LANE)
    Fip = _round_up(Fin, _LANE)
    Fop = _round_up(Fout, _LANE)

    x_p = _pad_last2(x, Np, Fip).astype(cdt)
    adj_p = _pad_last2(adj, Np, Np).astype(cdt)
    w_p = _pad_last2(weight, Fip, Fop).astype(cdt)
    if bias is None:
        b_p = jnp.zeros((1, Fop), jnp.float32)   # single kernel handles bias / no-bias
    else:
        b_p = _pad_last2(bias.reshape(1, Fout).astype(jnp.float32), 1, Fop)

    # Stage 1: fuse the weight matmul across the batch (one big MXU matmul).
    support = _matmul(x_p.reshape(B * Np, Fip), w_p, cdt).reshape(B, Np, Fop)

    # Stage 2: tiled batched adj @ support with fused bias / activation.
    out_p = _bmm_bias(adj_p, support, b_p, out_dtype, leaky_relu_slope)
    return out_p[:, :N, :Fout]


def discriminator_graph_branch(nodes, adj, feature, w1, w2):
    """The GCN branch of Discriminator.forward.

    nodes: [B, N, 40], adj: [B, N, N], feature: [B, 1, D], w1: [40, 1024], w2: [1024, D].
    Returns c: [B, N]  (= squeeze(feature @ gc2(relu(gc1(nodes,adj)), adj)^T)).
    """
    c = graph_convolution(nodes, adj, w1, None, leaky_relu_slope=0.2)   # gc1 + LeakyReLU(0.2)
    c = graph_convolution(c, adj, w2, None)                              # gc2
    # Final batched vec-mat (feature @ c^T): tiny, done in plain JAX.
    return jnp.einsum('bod,bnd->bon', feature, c,
                      precision=jax.lax.Precision.HIGHEST)[:, 0, :]


if __name__ == "__main__":
    key = jax.random.PRNGKey(0)
    k1, k2, k3, k4, k5, k6, k7 = jax.random.split(key, 7)
    HI = jax.lax.Precision.HIGHEST

    # --- Unit test of the GCN kernel at small shapes (bias & no-bias paths) ---
    B, N, Fin, Fout = 2, 16, 32, 8
    x = jax.random.normal(k1, (B, N, Fin), dtype=jnp.float32)
    adj = jax.random.uniform(k2, (B, N, N), dtype=jnp.float32)
    stdv = 1.0 / math.sqrt(Fout)
    w = jax.random.uniform(k3, (Fin, Fout), minval=-stdv, maxval=stdv, dtype=jnp.float32)
    b = jax.random.uniform(k4, (1, 1, Fout), minval=-stdv, maxval=stdv, dtype=jnp.float32)

    out = jax.block_until_ready(graph_convolution(x, adj, w, b))
    ref = jnp.matmul(adj, jnp.matmul(x, w, precision=HI), precision=HI) + b
    assert out.shape == (B, N, Fout)
    assert jnp.allclose(out, ref, atol=1e-4, rtol=1e-4), "GCN mismatch (bias)"

    out_nb = jax.block_until_ready(graph_convolution(x, adj, w, None))
    ref_nb = jnp.matmul(adj, jnp.matmul(x, w, precision=HI), precision=HI)
    assert jnp.allclose(out_nb, ref_nb, atol=1e-4, rtol=1e-4), "GCN mismatch (no bias)"

    # --- Graph branch of Discriminator.forward (gc1 -> LeakyReLU -> gc2 -> feature matmul) ---
    Bn, Nn, curr_dim = 2, 10, 2048            # curr_dim = 64 * 2**(repeat_num-1)
    nodes = jax.random.normal(k5, (Bn, Nn, 40), dtype=jnp.float32)
    adj2 = jax.random.uniform(k6, (Bn, Nn, Nn), dtype=jnp.float32)
    s1 = 1.0 / math.sqrt(1024)
    w1 = jax.random.uniform(k7, (40, 1024), minval=-s1, maxval=s1, dtype=jnp.float32)
    kw2, kf = jax.random.split(jax.random.PRNGKey(1))
    s2 = 1.0 / math.sqrt(curr_dim)
    w2 = jax.random.uniform(kw2, (1024, curr_dim), minval=-s2, maxval=s2, dtype=jnp.float32)
    feature = jax.random.normal(kf, (Bn, 1, curr_dim), dtype=jnp.float32)

    c = jax.block_until_ready(discriminator_graph_branch(nodes, adj2, feature, w1, w2))

    def _leaky(v, s):
        return jnp.where(v >= 0, v, s * v)

    c1_ref = _leaky(jnp.matmul(adj2, jnp.matmul(nodes, w1, precision=HI), precision=HI), 0.2)
    c2_ref = jnp.matmul(adj2, jnp.matmul(c1_ref, w2, precision=HI), precision=HI)
    c_ref = jnp.einsum('bod,bnd->bon', feature, c2_ref, precision=HI)[:, 0, :]
    assert c.shape == (Bn, Nn)
    assert jnp.allclose(c, c_ref, atol=5e-2, rtol=5e-3), "graph-branch mismatch"

    print("KERNEL_OK")
</pallas_src>

<mosaic_0001>
module attributes {stable_mosaic.version = 11 : i64} {
  func.func @_matmul_kernel(%arg0: i32, %arg1: i32, %arg2: i32, %arg3: memref<256x128xf32, #tpu.memory_space<vmem>>, %arg4: memref<128x128xf32, #tpu.memory_space<vmem>>, %arg5: memref<256x128xf32, #tpu.memory_space<vmem>>, %arg6: memref<256x128xf32, #tpu.memory_space<vmem>>) attributes {dimension_semantics = [#tpu.dimension_semantics<parallel>, #tpu.dimension_semantics<parallel>, #tpu.dimension_semantics<arbitrary>], iteration_bounds = array<i64: 1, 1, 1>, scalar_prefetch = 0 : i64, scratch_operands = 1 : i64, tpu.core_type = #tpu.core_type<tc>, window_params = [{transform_indices = @transform_0, window_bounds = array<i64: 256, 128>}, {transform_indices = @transform_1, window_bounds = array<i64: 128, 128>}, {transform_indices = @transform_2, window_bounds = array<i64: 256, 128>}]} {
    %c0_i32 = arith.constant 0 : i32
    %0 = arith.cmpi eq, %arg2, %c0_i32 : i32
    %1 = arith.extui %0 : i1 to i32
    %c0_i32_0 = arith.constant 0 : i32
    %2 = arith.cmpi ne, %1, %c0_i32_0 : i32
    scf.if %2 {
      %cst_10 = arith.constant 0.000000e+00 : f32
      %12 = vector.broadcast %cst_10 : f32 to vector<256x128xf32>
      %c0_11 = arith.constant 0 : index
      %c0_12 = arith.constant 0 : index
      %13 = vector.load %arg6[%c0_11, %c0_12] : memref<256x128xf32, #tpu.memory_space<vmem>>, vector<256x128xf32>
      tpu.vector_store %arg6[%c0_11, %c0_12], %12 {strides = array<i32>} : memref<256x128xf32, #tpu.memory_space<vmem>>, vector<256x128xf32>,
    } else {
    }
    %c0 = arith.constant 0 : index
    %c0_1 = arith.constant 0 : index
    %3 = vector.load %arg6[%c0, %c0_1] : memref<256x128xf32, #tpu.memory_space<vmem>>, vector<256x128xf32>
    %c0_2 = arith.constant 0 : index
    %c0_3 = arith.constant 0 : index
    %4 = vector.load %arg3[%c0_2, %c0_3] : memref<256x128xf32, #tpu.memory_space<vmem>>, vector<256x128xf32>
    %c0_4 = arith.constant 0 : index
    %c0_5 = arith.constant 0 : index
    %5 = vector.load %arg4[%c0_4, %c0_5] : memref<128x128xf32, #tpu.memory_space<vmem>>, vector<128x128xf32>
    %cst = arith.constant dense<0.000000e+00> : vector<256x128xf32>
    %6 = tpu.matmul %4, %5, %cst {dimension_numbers = #tpu.dot_dimension_numbers<[1], [0], [0], [1], [0, 0, 1, 1], [], []>} : vector<256x128xf32>, vector<128x128xf32>, vector<256x128xf32> -> vector<256x128xf32>
    %7 = arith.addf %3, %6 : vector<256x128xf32>
    %c0_6 = arith.constant 0 : index
    %c0_7 = arith.constant 0 : index
    %8 = vector.load %arg6[%c0_6, %c0_7] : memref<256x128xf32, #tpu.memory_space<vmem>>, vector<256x128xf32>
    tpu.vector_store %arg6[%c0_6, %c0_7], %7 {strides = array<i32>} : memref<256x128xf32, #tpu.memory_space<vmem>>, vector<256x128xf32>,
    %c0_i32_8 = arith.constant 0 : i32
    %9 = arith.cmpi eq, %arg2, %c0_i32_8 : i32
    %10 = arith.extui %9 : i1 to i32
    %c0_i32_9 = arith.constant 0 : i32
    %11 = arith.cmpi ne, %10, %c0_i32_9 : i32
    scf.if %11 {
      %c0_10 = arith.constant 0 : index
      %c0_11 = arith.constant 0 : index
      %12 = vector.load %arg6[%c0_10, %c0_11] : memref<256x128xf32, #tpu.memory_space<vmem>>, vector<256x128xf32>
      %c0_12 = arith.constant 0 : index
      %c0_13 = arith.constant 0 : index
      %13 = vector.load %arg5[%c0_12, %c0_13] : memref<256x128xf32, #tpu.memory_space<vmem>>, vector<256x128xf32>
      tpu.vector_store %arg5[%c0_12, %c0_13], %12 {strides = array<i32>} : memref<256x128xf32, #tpu.memory_space<vmem>>, vector<256x128xf32>,
    } else {
    }
    return
  }
  func.func @transform_0(%arg0: i32, %arg1: i32, %arg2: i32) -> (i32, i32) {
    %c0_i32 = arith.constant 0 : i32
    return %arg0, %arg2 : i32, i32
  }
  func.func @transform_1(%arg0: i32, %arg1: i32, %arg2: i32) -> (i32, i32) {
    %c0_i32 = arith.constant 0 : i32
    return %arg2, %arg1 : i32, i32
  }
  func.func @transform_2(%arg0: i32, %arg1: i32, %arg2: i32) -> (i32, i32) {
    %c0_i32 = arith.constant 0 : i32
    return %arg0, %arg1 : i32, i32
  }
}

</mosaic_0001>

<llo_original>
// kernel: tpu_custom_call.1
$region0: #{tpu_custom_call.1}
  #allocation0 [shape = 'u32[]', space=smem, size = 0x4, offset = 0x4, fixed_abs, tag = 'smem constant byte address 0x4 - core index']
  #allocation1 [shape = 'u32[72,128]{1,0:T(1,128)}', space=vmem, size = 0x9000, scoped, tag = 'internal scratch']
  #allocation2 [shape = 'f32[256,128]{1,0:T(8,128)}', space=vmem, size = 0x20000, scoped, tag = 'scratch operand']
  %s0 = inlined_call_operand.hbm [shape: f32[256,128], index: 0, kind: input, shape index: {}]
  %s1 = inlined_call_operand.hbm [shape: f32[128,128], index: 1, kind: input, shape index: {}]
  %s2 = inlined_call_operand.hbm [shape: f32[256,128], index: 2, kind: output, shape index: {}]
  %s3 = sld [smem:[#allocation0]]
  $region34: #{tpu_custom_call.1} parent=0
    _
  %s5 = ssub.s32 1, %s3
  %s6 = scalar_select 0, %s5, %s3
  $region1: #{tpu_custom_call.1} parent=0
    #allocation3 [shape = 'u8[131072]{0}', space=vmem, size = 0x20000, scoped, tag = 'input window, operand 0, single buffered']
    #allocation4 [shape = 's32[1]{0}', space=sflag, size = 0x4, scoped, tag = 'scoped memory for tpu_custom_call.1']
    #allocation5 [shape = 's32[1]{0}', space=sflag, size = 0x4, scoped, tag = 'scoped memory for tpu_custom_call.1']
    #allocation6 [shape = 'u8[65536]{0}', space=vmem, size = 0x10000, scoped, tag = 'input window, operand 1, single buffered']
    #allocation7 [shape = 's32[1]{0}', space=sflag, size = 0x4, scoped, tag = 'scoped memory for tpu_custom_call.1']
    #allocation8 [shape = 'u8[131072]{0}', space=vmem, size = 0x20000, scoped, tag = 'output window, operand 0, single buffered']
    %7 = vsyncpa [#allocation4], 0
    %8 = vsyncpa [#allocation7], 0
    %9 = vsyncpa [#allocation5], 0
    // Predicated region
    $region2: #{tpu_custom_call.1} parent=1 // pred_check
      _
    $region3: #{tpu_custom_call.1} parent=1 // pred_check_branch
      %11 = sbr.rel (0) target = $region5
    $region4: #{tpu_custom_call.1} parent=1 // pred_region
      %13 = vsyncadd [#allocation4], 0
      %s14 = sshll.u32 %s0, 4
      %s15 = int_to_ptr.hbm [resolvable:$true] %s14
      %s16 = sshll.u32 [#allocation3], 4
      %s17 = int_to_ptr.vmem [resolvable:$true] %s16
      %22 = dma.hbm_to_vmem [thread:$0]  %s15, 4096, %s17, [#allocation4], 128, 128, 8
    $region5: #{tpu_custom_call.1} parent=1 // pred_fallthru
      _
    // Predicated region
    $region6: #{tpu_custom_call.1} parent=1 // pred_check
      _
    $region7: #{tpu_custom_call.1} parent=1 // pred_check_branch
      %24 = sbr.rel (0) target = $region9
    $region8: #{tpu_custom_call.1} parent=1 // pred_region
      %26 = vsyncadd [#allocation7], 0
      %s27 = sshll.u32 %s1, 4
      %s28 = int_to_ptr.hbm [resolvable:$true] %s27
      %s29 = sshll.u32 [#allocation6], 4
      %s30 = int_to_ptr.vmem [resolvable:$true] %s29
      %35 = dma.hbm_to_vmem [thread:$0]  %s28, 2048, %s30, [#allocation7], 128, 128, 8
    $region9: #{tpu_custom_call.1} parent=1 // pred_fallthru
      _
    // Predicated region
    $region10: #{tpu_custom_call.1} parent=1 // pred_check
      _
    $region11: #{tpu_custom_call.1} parent=1 // pred_check_branch
      %37 = sbr.rel (0) target = $region13
    $region12: #{tpu_custom_call.1} parent=1 // pred_region
      %39 = dma.done [#allocation4], 4096
    $region13: #{tpu_custom_call.1} parent=1 // pred_fallthru
      _
    // Predicated region
    $region14: #{tpu_custom_call.1} parent=1 // pred_check
      _
    $region15: #{tpu_custom_call.1} parent=1 // pred_check_branch
      %41 = sbr.rel (0) target = $region17
    $region16: #{tpu_custom_call.1} parent=1 // pred_region
      %43 = dma.done [#allocation7], 2048
    $region17: #{tpu_custom_call.1} parent=1 // pred_fallthru
      _
    %p44 = scmp.eq.s32.totalorder 0, 0
    // Predicated region
    $region18: #{tpu_custom_call.1} parent=1 // pred_check
      %p45 = pneg %p44
    $region19: #{tpu_custom_call.1} parent=1 // pred_check_branch
      %47 = sbr.rel (%p45) target = $region21
    $region20: #{tpu_custom_call.1} parent=1 // pred_region
      %48 = vst [vmem:[#allocation2] sm:$0xff] 0.0
      %49 = vst [vmem:[#allocation2 + $0x8] sm:$0xff] 0.0
      %50 = vst [vmem:[#allocation2 + $0x10] sm:$0xff] 0.0
      %51 = vst [vmem:[#allocation2 + $0x18] sm:$0xff] 0.0
      %52 = vst [vmem:[#allocation2 + $0x20] sm:$0xff] 0.0
      %53 = vst [vmem:[#allocation2 + $0x28] sm:$0xff] 0.0
      %54 = vst [vmem:[#allocation2 + $0x30] sm:$0xff] 0.0
      %55 = vst [vmem:[#allocation2 + $0x38] sm:$0xff] 0.0
      %56 = vst [vmem:[#allocation2 + $0x40] sm:$0xff] 0.0
      %57 = vst [vmem:[#allocation2 + $0x48] sm:$0xff] 0.0
      %58 = vst [vmem:[#allocation2 + $0x50] sm:$0xff] 0.0
      %59 = vst [vmem:[#allocation2 + $0x58] sm:$0xff] 0.0
      %60 = vst [vmem:[#allocation2 + $0x60] sm:$0xff] 0.0
      %61 = vst [vmem:[#allocation2 + $0x68] sm:$0xff] 0.0
      %62 = vst [vmem:[#allocation2 + $0x70] sm:$0xff] 0.0
      %63 = vst [vmem:[#allocation2 + $0x78] sm:$0xff] 0.0
      %64 = vst [vmem:[#allocation2 + $0x80] sm:$0xff] 0.0
      %65 = vst [vmem:[#allocation2 + $0x88] sm:$0xff] 0.0
      %66 = vst [vmem:[#allocation2 + $0x90] sm:$0xff] 0.0
      %67 = vst [vmem:[#allocation2 + $0x98] sm:$0xff] 0.0
      %68 = vst [vmem:[#allocation2 + $0xa0] sm:$0xff] 0.0
      %69 = vst [vmem:[#allocation2 + $0xa8] sm:$0xff] 0.0
      %70 = vst [vmem:[#allocation2 + $0xb0] sm:$0xff] 0.0
      %71 = vst [vmem:[#allocation2 + $0xb8] sm:$0xff] 0.0
      %72 = vst [vmem:[#allocation2 + $0xc0] sm:$0xff] 0.0
      %73 = vst [vmem:[#allocation2 + $0xc8] sm:$0xff] 0.0
      %74 = vst [vmem:[#allocation2 + $0xd0] sm:$0xff] 0.0
      %75 = vst [vmem:[#allocation2 + $0xd8] sm:$0xff] 0.0
      %76 = vst [vmem:[#allocation2 + $0xe0] sm:$0xff] 0.0
      %77 = vst [vmem:[#allocation2 + $0xe8] sm:$0xff] 0.0
      %78 = vst [vmem:[#allocation2 + $0xf0] sm:$0xff] 0.0
      %79 = vst [vmem:[#allocation2 + $0xf8] sm:$0xff] 0.0
    $region21: #{tpu_custom_call.1} parent=1 // pred_fallthru
      _
    %v80 = vld [vmem:[#allocation2] sm:$0xff]
    %v81 = vld [vmem:[#allocation2 + $0x8] sm:$0xff]
    %v82 = vld [vmem:[#allocation2 + $0x10] sm:$0xff]
    %v83 = vld [vmem:[#allocation2 + $0x18] sm:$0xff]
    %v84 = vld [vmem:[#allocation2 + $0x20] sm:$0xff]
    %v85 = vld [vmem:[#allocation2 + $0x28] sm:$0xff]
    %v86 = vld [vmem:[#allocation2 + $0x30] sm:$0xff]
    %v87 = vld [vmem:[#allocation2 + $0x38] sm:$0xff]
    %v88 = vld [vmem:[#allocation2 + $0x40] sm:$0xff]
    %v89 = vld [vmem:[#allocation2 + $0x48] sm:$0xff]
    %v90 = vld [vmem:[#allocation2 + $0x50] sm:$0xff]
    %v91 = vld [vmem:[#allocation2 + $0x58] sm:$0xff]
    %v92 = vld [vmem:[#allocation2 + $0x60] sm:$0xff]
    %v93 = vld [vmem:[#allocation2 + $0x68] sm:$0xff]
    %v94 = vld [vmem:[#allocation2 + $0x70] sm:$0xff]
    %v95 = vld [vmem:[#allocation2 + $0x78] sm:$0xff]
    %v96 = vld [vmem:[#allocation2 + $0x80] sm:$0xff]
    %v97 = vld [vmem:[#allocation2 + $0x88] sm:$0xff]
    %v98 = vld [vmem:[#allocation2 + $0x90] sm:$0xff]
    %v99 = vld [vmem:[#allocation2 + $0x98] sm:$0xff]
    %v100 = vld [vmem:[#allocation2 + $0xa0] sm:$0xff]
    %v101 = vld [vmem:[#allocation2 + $0xa8] sm:$0xff]
    %v102 = vld [vmem:[#allocation2 + $0xb0] sm:$0xff]
    %v103 = vld [vmem:[#allocation2 + $0xb8] sm:$0xff]
    %v104 = vld [vmem:[#allocation2 + $0xc0] sm:$0xff]
    %v105 = vld [vmem:[#allocation2 + $0xc8] sm:$0xff]
    %v106 = vld [vmem:[#allocation2 + $0xd0] sm:$0xff]
    %v107 = vld [vmem:[#allocation2 + $0xd8] sm:$0xff]
    %v108 = vld [vmem:[#allocation2 + $0xe0] sm:$0xff]
    %v109 = vld [vmem:[#allocation2 + $0xe8] sm:$0xff]
    %v110 = vld [vmem:[#allocation2 + $0xf0] sm:$0xff]
    %v111 = vld [vmem:[#allocation2 + $0xf8] sm:$0xff]
    %v112 = vld [vmem:[#allocation3] sm:$0xff]
    %v113 = vld [vmem:[#allocation3 + $0x8] sm:$0xff]
    %v114 = vld [vmem:[#allocation3 + $0x10] sm:$0xff]
    %v115 = vld [vmem:[#allocation3 + $0x18] sm:$0xff]
    %v116 = vld [vmem:[#allocation3 + $0x20] sm:$0xff]
    %v117 = vld [vmem:[#allocation3 + $0x28] sm:$0xff]
    %v118 = vld [vmem:[#allocation3 + $0x30] sm:$0xff]
    %v119 = vld [vmem:[#allocation3 + $0x38] sm:$0xff]
    %v120 = vld [vmem:[#allocation3 + $0x40] sm:$0xff]
    %v121 = vld [vmem:[#allocation3 + $0x48] sm:$0xff]
    %v122 = vld [vmem:[#allocation3 + $0x50] sm:$0xff]
    %v123 = vld [vmem:[#allocation3 + $0x58] sm:$0xff]
    %v124 = vld [vmem:[#allocation3 + $0x60] sm:$0xff]
    %v125 = vld [vmem:[#allocation3 + $0x68] sm:$0xff]
    %v126 = vld [vmem:[#allocation3 + $0x70] sm:$0xff]
    %v127 = vld [vmem:[#allocation3 + $0x78] sm:$0xff]
    %v128 = vld [vmem:[#allocation3 + $0x80] sm:$0xff]
    %v129 = vld [vmem:[#allocation3 + $0x88] sm:$0xff]
    %v130 = vld [vmem:[#allocation3 + $0x90] sm:$0xff]
    %v131 = vld [vmem:[#allocation3 + $0x98] sm:$0xff]
    %v132 = vld [vmem:[#allocation3 + $0xa0] sm:$0xff]
    %v133 = vld [vmem:[#allocation3 + $0xa8] sm:$0xff]
    %v134 = vld [vmem:[#allocation3 + $0xb0] sm:$0xff]
    %v135 = vld [vmem:[#allocation3 + $0xb8] sm:$0xff]
    %v136 = vld [vmem:[#allocation3 + $0xc0] sm:$0xff]
    %v137 = vld [vmem:[#allocation3 + $0xc8] sm:$0xff]
    %v138 = vld [vmem:[#allocation3 + $0xd0] sm:$0xff]
    %v139 = vld [vmem:[#allocation3 + $0xd8] sm:$0xff]
    %v140 = vld [vmem:[#allocation3 + $0xe0] sm:$0xff]
    %v141 = vld [vmem:[#allocation3 + $0xe8] sm:$0xff]
    %v142 = vld [vmem:[#allocation3 + $0xf0] sm:$0xff]
    %v143 = vld [vmem:[#allocation3 + $0xf8] sm:$0xff]
    %v144 = vld [vmem:[#allocation6] sm:$0xff]
    %v145 = vld [vmem:[#allocation6 + $0x8] sm:$0xff]
    %v146 = vld [vmem:[#allocation6 + $0x10] sm:$0xff]
    %v147 = vld [vmem:[#allocation6 + $0x18] sm:$0xff]
    %v148 = vld [vmem:[#allocation6 + $0x20] sm:$0xff]
    %v149 = vld [vmem:[#allocation6 + $0x28] sm:$0xff]
    %v150 = vld [vmem:[#allocation6 + $0x30] sm:$0xff]
    %v151 = vld [vmem:[#allocation6 + $0x38] sm:$0xff]
    %v152 = vld [vmem:[#allocation6 + $0x40] sm:$0xff]
    %v153 = vld [vmem:[#allocation6 + $0x48] sm:$0xff]
    %v154 = vld [vmem:[#allocation6 + $0x50] sm:$0xff]
    %v155 = vld [vmem:[#allocation6 + $0x58] sm:$0xff]
    %v156 = vld [vmem:[#allocation6 + $0x60] sm:$0xff]
    %v157 = vld [vmem:[#allocation6 + $0x68] sm:$0xff]
    %v158 = vld [vmem:[#allocation6 + $0x70] sm:$0xff]
    %v159 = vld [vmem:[#allocation6 + $0x78] sm:$0xff]
    %160 = vmatpush.msra.mxu0 %v159
    %161 = vmatpush.msra.mxu0 %v158
    %162 = vmatpush.msra.mxu0 %v157
    %163 = vmatpush.msra.mxu0 %v156
    %164 = vmatpush.msra.mxu0 %v155
    %165 = vmatpush.msra.mxu0 %v154
    %166 = vmatpush.msra.mxu0 %v153
    %167 = vmatpush.msra.mxu0 %v152
    %168 = vmatpush.msra.mxu0 %v151
    %169 = vmatpush.msra.mxu0 %v150
    %170 = vmatpush.msra.mxu0 %v149
    %171 = vmatpush.msra.mxu0 %v148
    %172 = vmatpush.msra.mxu0 %v147
    %173 = vmatpush.msra.mxu0 %v146
    %174 = vmatpush.msra.mxu0 %v145
    %175 = vmatpush.msra.mxu0 %v144
    %176 = vmatmul.f32.gmra.mxu0 %v112
    %v177 = vpop.f32.mrf.mxu0
    %v178 = vadd.f32 0.0, %v177
    %179 = vmatmul.f32.gmra.mxu0 %v113
    %v180 = vpop.f32.mrf.mxu0
    %v181 = vadd.f32 0.0, %v180
    %182 = vmatmul.f32.gmra.mxu0 %v114
    %v183 = vpop.f32.mrf.mxu0
    %v184 = vadd.f32 0.0, %v183
    %185 = vmatmul.f32.gmra.mxu0 %v115
    %v186 = vpop.f32.mrf.mxu0
    %v187 = vadd.f32 0.0, %v186
    %188 = vmatmul.f32.gmra.mxu0 %v116
    %v189 = vpop.f32.mrf.mxu0
    %v190 = vadd.f32 0.0, %v189
    %191 = vmatmul.f32.gmra.mxu0 %v117
    %v192 = vpop.f32.mrf.mxu0
    %v193 = vadd.f32 0.0, %v192
    %194 = vmatmul.f32.gmra.mxu0 %v118
    %v195 = vpop.f32.mrf.mxu0
    %v196 = vadd.f32 0.0, %v195
    %197 = vmatmul.f32.gmra.mxu0 %v119
    %v198 = vpop.f32.mrf.mxu0
    %v199 = vadd.f32 0.0, %v198
    %200 = vmatmul.f32.gmra.mxu0 %v120
    %v201 = vpop.f32.mrf.mxu0
    %v202 = vadd.f32 0.0, %v201
    %203 = vmatmul.f32.gmra.mxu0 %v121
    %v204 = vpop.f32.mrf.mxu0
    %v205 = vadd.f32 0.0, %v204
    %206 = vmatmul.f32.gmra.mxu0 %v122
    %v207 = vpop.f32.mrf.mxu0
    %v208 = vadd.f32 0.0, %v207
    %209 = vmatmul.f32.gmra.mxu0 %v123
    %v210 = vpop.f32.mrf.mxu0
    %v211 = vadd.f32 0.0, %v210
    %212 = vmatmul.f32.gmra.mxu0 %v124
    %v213 = vpop.f32.mrf.mxu0
    %v214 = vadd.f32 0.0, %v213
    %215 = vmatmul.f32.gmra.mxu0 %v125
    %v216 = vpop.f32.mrf.mxu0
    %v217 = vadd.f32 0.0, %v216
    %218 = vmatmul.f32.gmra.mxu0 %v126
    %v219 = vpop.f32.mrf.mxu0
    %v220 = vadd.f32 0.0, %v219
    %221 = vmatmul.f32.gmra.mxu0 %v127
    %v222 = vpop.f32.mrf.mxu0
    %v223 = vadd.f32 0.0, %v222
    %224 = vmatmul.f32.gmra.mxu0 %v128
    %v225 = vpop.f32.mrf.mxu0
    %v226 = vadd.f32 0.0, %v225
    %227 = vmatmul.f32.gmra.mxu0 %v129
    %v228 = vpop.f32.mrf.mxu0
    %v229 = vadd.f32 0.0, %v228
    %230 = vmatmul.f32.gmra.mxu0 %v130
    %v231 = vpop.f32.mrf.mxu0
    %v232 = vadd.f32 0.0, %v231
    %233 = vmatmul.f32.gmra.mxu0 %v131
    %v234 = vpop.f32.mrf.mxu0
    %v235 = vadd.f32 0.0, %v234
    %236 = vmatmul.f32.gmra.mxu0 %v132
    %v237 = vpop.f32.mrf.mxu0
    %v238 = vadd.f32 0.0, %v237
    %239 = vmatmul.f32.gmra.mxu0 %v133
    %v240 = vpop.f32.mrf.mxu0
    %v241 = vadd.f32 0.0, %v240
    %242 = vmatmul.f32.gmra.mxu0 %v134
    %v243 = vpop.f32.mrf.mxu0
    %v244 = vadd.f32 0.0, %v243
    %245 = vmatmul.f32.gmra.mxu0 %v135
    %v246 = vpop.f32.mrf.mxu0
    %v247 = vadd.f32 0.0, %v246
    %248 = vmatmul.f32.gmra.mxu0 %v136
    %v249 = vpop.f32.mrf.mxu0
    %v250 = vadd.f32 0.0, %v249
    %251 = vmatmul.f32.gmra.mxu0 %v137
    %v252 = vpop.f32.mrf.mxu0
    %v253 = vadd.f32 0.0, %v252
    %254 = vmatmul.f32.gmra.mxu0 %v138
    %v255 = vpop.f32.mrf.mxu0
    %v256 = vadd.f32 0.0, %v255
    %257 = vmatmul.f32.gmra.mxu0 %v139
    %v258 = vpop.f32.mrf.mxu0
    %v259 = vadd.f32 0.0, %v258
    %260 = vmatmul.f32.gmra.mxu0 %v140
    %v261 = vpop.f32.mrf.mxu0
    %v262 = vadd.f32 0.0, %v261
    %263 = vmatmul.f32.gmra.mxu0 %v141
    %v264 = vpop.f32.mrf.mxu0
    %v265 = vadd.f32 0.0, %v264
    %266 = vmatmul.f32.gmra.mxu0 %v142
    %v267 = vpop.f32.mrf.mxu0
    %v268 = vadd.f32 0.0, %v267
    %269 = vmatmul.f32.gmra.mxu0 %v143
    %v270 = vpop.f32.mrf.mxu0
    %v271 = vadd.f32 0.0, %v270
    %272 = vdwg.mxu0
    %v273 = vadd.f32 %v80, %v178
    %v274 = vadd.f32 %v81, %v181
    %v275 = vadd.f32 %v82, %v184
    %v276 = vadd.f32 %v83, %v187
    %v277 = vadd.f32 %v84, %v190
    %v278 = vadd.f32 %v85, %v193
    %v279 = vadd.f32 %v86, %v196
    %v280 = vadd.f32 %v87, %v199
    %v281 = vadd.f32 %v88, %v202
    %v282 = vadd.f32 %v89, %v205
    %v283 = vadd.f32 %v90, %v208
    %v284 = vadd.f32 %v91, %v211
    %v285 = vadd.f32 %v92, %v214
    %v286 = vadd.f32 %v93, %v217
    %v287 = vadd.f32 %v94, %v220
    %v288 = vadd.f32 %v95, %v223
    %v289 = vadd.f32 %v96, %v226
    %v290 = vadd.f32 %v97, %v229
    %v291 = vadd.f32 %v98, %v232
    %v292 = vadd.f32 %v99, %v235
    %v293 = vadd.f32 %v100, %v238
    %v294 = vadd.f32 %v101, %v241
    %v295 = vadd.f32 %v102, %v244
    %v296 = vadd.f32 %v103, %v247
    %v297 = vadd.f32 %v104, %v250
    %v298 = vadd.f32 %v105, %v253
    %v299 = vadd.f32 %v106, %v256
    %v300 = vadd.f32 %v107, %v259
    %v301 = vadd.f32 %v108, %v262
    %v302 = vadd.f32 %v109, %v265
    %v303 = vadd.f32 %v110, %v268
    %v304 = vadd.f32 %v111, %v271
    %305 = vst [vmem:[#allocation2] sm:$0xff] %v273
    %306 = vst [vmem:[#allocation2 + $0x8] sm:$0xff] %v274
    %307 = vst [vmem:[#allocation2 + $0x10] sm:$0xff] %v275
    %308 = vst [vmem:[#allocation2 + $0x18] sm:$0xff] %v276
    %309 = vst [vmem:[#allocation2 + $0x20] sm:$0xff] %v277
    %310 = vst [vmem:[#allocation2 + $0x28] sm:$0xff] %v278
    %311 = vst [vmem:[#allocation2 + $0x30] sm:$0xff] %v279
    %312 = vst [vmem:[#allocation2 + $0x38] sm:$0xff] %v280
    %313 = vst [vmem:[#allocation2 + $0x40] sm:$0xff] %v281
    %314 = vst [vmem:[#allocation2 + $0x48] sm:$0xff] %v282
    %315 = vst [vmem:[#allocation2 + $0x50] sm:$0xff] %v283
    %316 = vst [vmem:[#allocation2 + $0x58] sm:$0xff] %v284
    %317 = vst [vmem:[#allocation2 + $0x60] sm:$0xff] %v285
    %318 = vst [vmem:[#allocation2 + $0x68] sm:$0xff] %v286
    %319 = vst [vmem:[#allocation2 + $0x70] sm:$0xff] %v287
    %320 = vst [vmem:[#allocation2 + $0x78] sm:$0xff] %v288
    %321 = vst [vmem:[#allocation2 + $0x80] sm:$0xff] %v289
    %322 = vst [vmem:[#allocation2 + $0x88] sm:$0xff] %v290
    %323 = vst [vmem:[#allocation2 + $0x90] sm:$0xff] %v291
    %324 = vst [vmem:[#allocation2 + $0x98] sm:$0xff] %v292
    %325 = vst [vmem:[#allocation2 + $0xa0] sm:$0xff] %v293
    %326 = vst [vmem:[#allocation2 + $0xa8] sm:$0xff] %v294
    %327 = vst [vmem:[#allocation2 + $0xb0] sm:$0xff] %v295
    %328 = vst [vmem:[#allocation2 + $0xb8] sm:$0xff] %v296
    %329 = vst [vmem:[#allocation2 + $0xc0] sm:$0xff] %v297
    %330 = vst [vmem:[#allocation2 + $0xc8] sm:$0xff] %v298
    %331 = vst [vmem:[#allocation2 + $0xd0] sm:$0xff] %v299
    %332 = vst [vmem:[#allocation2 + $0xd8] sm:$0xff] %v300
    %333 = vst [vmem:[#allocation2 + $0xe0] sm:$0xff] %v301
    %334 = vst [vmem:[#allocation2 + $0xe8] sm:$0xff] %v302
    %335 = vst [vmem:[#allocation2 + $0xf0] sm:$0xff] %v303
    %336 = vst [vmem:[#allocation2 + $0xf8] sm:$0xff] %v304
    // Predicated region
    $region22: #{tpu_custom_call.1} parent=1 // pred_check
      %p337 = pneg %p44
    $region23: #{tpu_custom_call.1} parent=1 // pred_check_branch
      %339 = sbr.rel (%p337) target = $region25
    $region24: #{tpu_custom_call.1} parent=1 // pred_region
      %v340 = vld [vmem:[#allocation2] sm:$0xff]
      %v341 = vld [vmem:[#allocation2 + $0x8] sm:$0xff]
      %v342 = vld [vmem:[#allocation2 + $0x10] sm:$0xff]
      %v343 = vld [vmem:[#allocation2 + $0x18] sm:$0xff]
      %v344 = vld [vmem:[#allocation2 + $0x20] sm:$0xff]
      %v345 = vld [vmem:[#allocation2 + $0x28] sm:$0xff]
      %v346 = vld [vmem:[#allocation2 + $0x30] sm:$0xff]
      %v347 = vld [vmem:[#allocation2 + $0x38] sm:$0xff]
      %v348 = vld [vmem:[#allocation2 + $0x40] sm:$0xff]
      %v349 = vld [vmem:[#allocation2 + $0x48] sm:$0xff]
      %v350 = vld [vmem:[#allocation2 + $0x50] sm:$0xff]
      %v351 = vld [vmem:[#allocation2 + $0x58] sm:$0xff]
      %v352 = vld [vmem:[#allocation2 + $0x60] sm:$0xff]
      %v353 = vld [vmem:[#allocation2 + $0x68] sm:$0xff]
      %v354 = vld [vmem:[#allocation2 + $0x70] sm:$0xff]
      %v355 = vld [vmem:[#allocation2 + $0x78] sm:$0xff]
      %v356 = vld [vmem:[#allocation2 + $0x80] sm:$0xff]
      %v357 = vld [vmem:[#allocation2 + $0x88] sm:$0xff]
      %v358 = vld [vmem:[#allocation2 + $0x90] sm:$0xff]
      %v359 = vld [vmem:[#allocation2 + $0x98] sm:$0xff]
      %v360 = vld [vmem:[#allocation2 + $0xa0] sm:$0xff]
      %v361 = vld [vmem:[#allocation2 + $0xa8] sm:$0xff]
      %v362 = vld [vmem:[#allocation2 + $0xb0] sm:$0xff]
      %v363 = vld [vmem:[#allocation2 + $0xb8] sm:$0xff]
      %v364 = vld [vmem:[#allocation2 + $0xc0] sm:$0xff]
      %v365 = vld [vmem:[#allocation2 + $0xc8] sm:$0xff]
      %v366 = vld [vmem:[#allocation2 + $0xd0] sm:$0xff]
      %v367 = vld [vmem:[#allocation2 + $0xd8] sm:$0xff]
      %v368 = vld [vmem:[#allocation2 + $0xe0] sm:$0xff]
      %v369 = vld [vmem:[#allocation2 + $0xe8] sm:$0xff]
      %v370 = vld [vmem:[#allocation2 + $0xf0] sm:$0xff]
      %v371 = vld [vmem:[#allocation2 + $0xf8] sm:$0xff]
      %372 = vst [vmem:[#allocation8] sm:$0xff] %v340
      %373 = vst [vmem:[#allocation8 + $0x8] sm:$0xff] %v341
      %374 = vst [vmem:[#allocation8 + $0x10] sm:$0xff] %v342
      %375 = vst [vmem:[#allocation8 + $0x18] sm:$0xff] %v343
      %376 = vst [vmem:[#allocation8 + $0x20] sm:$0xff] %v344
      %377 = vst [vmem:[#allocation8 + $0x28] sm:$0xff] %v345
      %378 = vst [vmem:[#allocation8 + $0x30] sm:$0xff] %v346
      %379 = vst [vmem:[#allocation8 + $0x38] sm:$0xff] %v347
      %380 = vst [vmem:[#allocation8 + $0x40] sm:$0xff] %v348
      %381 = vst [vmem:[#allocation8 + $0x48] sm:$0xff] %v349
      %382 = vst [vmem:[#allocation8 + $0x50] sm:$0xff] %v350
      %383 = vst [vmem:[#allocation8 + $0x58] sm:$0xff] %v351
      %384 = vst [vmem:[#allocation8 + $0x60] sm:$0xff] %v352
      %385 = vst [vmem:[#allocation8 + $0x68] sm:$0xff] %v353
      %386 = vst [vmem:[#allocation8 + $0x70] sm:$0xff] %v354
      %387 = vst [vmem:[#allocation8 + $0x78] sm:$0xff] %v355
      %388 = vst [vmem:[#allocation8 + $0x80] sm:$0xff] %v356
      %389 = vst [vmem:[#allocation8 + $0x88] sm:$0xff] %v357
      %390 = vst [vmem:[#allocation8 + $0x90] sm:$0xff] %v358
      %391 = vst [vmem:[#allocation8 + $0x98] sm:$0xff] %v359
      %392 = vst [vmem:[#allocation8 + $0xa0] sm:$0xff] %v360
      %393 = vst [vmem:[#allocation8 + $0xa8] sm:$0xff] %v361
      %394 = vst [vmem:[#allocation8 + $0xb0] sm:$0xff] %v362
      %395 = vst [vmem:[#allocation8 + $0xb8] sm:$0xff] %v363
      %396 = vst [vmem:[#allocation8 + $0xc0] sm:$0xff] %v364
      %397 = vst [vmem:[#allocation8 + $0xc8] sm:$0xff] %v365
      %398 = vst [vmem:[#allocation8 + $0xd0] sm:$0xff] %v366
      %399 = vst [vmem:[#allocation8 + $0xd8] sm:$0xff] %v367
      %400 = vst [vmem:[#allocation8 + $0xe0] sm:$0xff] %v368
      %401 = vst [vmem:[#allocation8 + $0xe8] sm:$0xff] %v369
      %402 = vst [vmem:[#allocation8 + $0xf0] sm:$0xff] %v370
      %403 = vst [vmem:[#allocation8 + $0xf8] sm:$0xff] %v371
    $region25: #{tpu_custom_call.1} parent=1 // pred_fallthru
      _
    // Predicated region
    $region26: #{tpu_custom_call.1} parent=1 // pred_check
      _
    $region27: #{tpu_custom_call.1} parent=1 // pred_check_branch
      %405 = sbr.rel (0) target = $region29
    $region28: #{tpu_custom_call.1} parent=1 // pred_region
      %407 = vsyncadd [#allocation5], 0
      %s408 = sshll.u32 [#allocation8], 4
      %s409 = int_to_ptr.vmem [resolvable:$true] %s408
      %s410 = sshll.u32 %s2, 4
      %s411 = int_to_ptr.hbm [resolvable:$true] %s410
      %416 = dma.vmem_to_hbm [thread:$0]  %s409, 4096, %s411, [#allocation5], 128, 128, 8
    $region29: #{tpu_custom_call.1} parent=1 // pred_fallthru
      _
    // Predicated region
    $region30: #{tpu_custom_call.1} parent=1 // pred_check
      _
    $region31: #{tpu_custom_call.1} parent=1 // pred_check_branch
      %418 = sbr.rel (0) target = $region33
    $region32: #{tpu_custom_call.1} parent=1 // pred_region
      %420 = dma.done [#allocation5], 4096
    $region33: #{tpu_custom_call.1} parent=1 // pred_fallthru
      _
    %421 = vsyncpa [#allocation4], 1
    %422 = vsyncpa [#allocation7], 1
    %423 = vsyncpa [#allocation5], 1

</llo_original>
